<compile_context>
chip_gen: v7x
topology: tpu7x:2x2x1
jax: 0.10.0
libtpu: 0.0.40
codegen_flags: <defaults>
</compile_context>

<pallas_src>
import functools

import jax
import jax.numpy as jnp
from jax.experimental import pallas as pl
from jax.experimental.pallas import tpu as pltpu


def _round_up(n, m):
    return (n + m - 1) // m * m


def _cdiv(a, b):
    return (a + b - 1) // b


# ----------------------------------------------------------------------------
# Hardware / feature probes (run eagerly at import, outside any jit trace).
# ----------------------------------------------------------------------------

def _vmem_capacity_bytes():
    """Physical per-core VMEM; conservative (v7x-sized) fallback."""
    try:
        return int(pltpu.get_tpu_info().vmem_capacity_bytes)
    except Exception:
        return 64 * 1024 * 1024


def _probe_single_buffer():
    """Can constant-index operands be single-buffered via pl.Buffered(1)?"""
    if not hasattr(pl, "Buffered"):
        return False
    try:
        def kern(x_ref, o_ref):
            o_ref[...] = x_ref[...] * 2.0

        f = pl.pallas_call(
            kern,
            out_shape=jax.ShapeDtypeStruct((16, 128), jnp.float32),
            grid=(2,),
            in_specs=[pl.BlockSpec((8, 128), lambda i: (0, 0),
                                   pipeline_mode=pl.Buffered(1))],
            out_specs=pl.BlockSpec((8, 128), lambda i: (i, 0)),
        )
        out = jax.block_until_ready(f(jnp.ones((8, 128), jnp.float32)))
        return bool(jnp.all(out == 2.0))
    except Exception:
        return False


def _probe_dynamic_lane_slice():
    """Does Mosaic accept a 128-aligned dynamic slice on the lane (last) dim?"""
    try:
        def kern(x_ref, o_ref):
            c = pl.multiple_of(pl.program_id(0) * 128, 128)
            o_ref[...] = x_ref[:, pl.ds(c, 128)]

        f = pl.pallas_call(
            kern,
            out_shape=jax.ShapeDtypeStruct((8, 256), jnp.float32),
            grid=(2,),
            in_specs=[pl.BlockSpec((8, 256), lambda i: (0, 0))],
            out_specs=pl.BlockSpec((8, 128), lambda i: (0, i)),
        )
        x = jnp.arange(8 * 256, dtype=jnp.float32).reshape(8, 256)
        out = jax.block_until_ready(f(x))
        return bool(jnp.all(out == x))
    except Exception:
        return False


_SINGLE_BUFFER_OK = _probe_single_buffer()
_DYN_LANE_SLICE_OK = _probe_dynamic_lane_slice()


def _spec(shape, index_map, *, single=False):
    """BlockSpec; optionally single-buffered (inner-loop-invariant blocks)."""
    if single and _SINGLE_BUFFER_OK:
        return pl.BlockSpec(shape, index_map, pipeline_mode=pl.Buffered(1))
    return pl.BlockSpec(shape, index_map)


# ----------------------------------------------------------------------------
# Kernels
# ----------------------------------------------------------------------------

def _resadd_full_kernel(x_ref, w_ref, b_ref, o_ref):
    """out = x + (x @ W + b) with the whole (H, H) weight resident in VMEM."""
    x = x_ref[...]                                             # (tm, H)
    fx = jnp.dot(x, w_ref[...], preferred_element_type=jnp.float32)
    fx = fx + b_ref[...].astype(jnp.float32)                   # bias (1, H)
    o_ref[...] = (x.astype(jnp.float32) + fx).astype(o_ref.dtype)


def _resadd_ntiled_kernel(x_ref, w_ref, b_ref, o_ref, *, col_axis, tn):
    """out[:, j] = x[:, j] + (x @ W[:, j] + b[j]).

    Residual columns are sliced from the already-resident full-K x block
    (128-aligned dynamic lane slice) -> x is read from HBM exactly once.
    """
    fx = jnp.dot(x_ref[...], w_ref[...],
                 preferred_element_type=jnp.float32)           # (tm, tn)
    fx = fx + b_ref[...].astype(jnp.float32)
    col0 = pl.multiple_of(pl.program_id(col_axis) * tn, 128)
    x_res = x_ref[:, pl.ds(col0, tn)]                          # VMEM re-read, cheap
    o_ref[...] = (x_res.astype(jnp.float32) + fx).astype(o_ref.dtype)


def _resadd_ntiled_dualx_kernel(x_ref, xcol_ref, w_ref, b_ref, o_ref):
    """Fallback when aligned dynamic lane slicing is unavailable: the residual
    columns arrive as a second (tm, tn) view of x (one extra HBM read)."""
    fx = jnp.dot(x_ref[...], w_ref[...],
                 preferred_element_type=jnp.float32)
    fx = fx + b_ref[...].astype(jnp.float32)
    o_ref[...] = (xcol_ref[...].astype(jnp.float32) + fx).astype(o_ref.dtype)


# ----------------------------------------------------------------------------
# Wrapper
# ----------------------------------------------------------------------------

@functools.partial(jax.jit, static_argnames=("tile_rows", "vmem_budget_bytes"))
def residual_add(x, w, b, *, tile_rows=None, vmem_budget_bytes=None):
    """ResidualAdd with fn = Linear(H, H):  out = x + (x @ w + b).

    x : [B, S, H]   w : [H, H]   b : [H]   ->   [B, S, H]
    """
    B, S, H = x.shape
    assert w.shape == (H, H) and b.shape == (H,)
    rows = B * S
    isz = jnp.dtype(x.dtype).itemsize
    pack = max(8, 32 // isz)          # sublane packing: 8 f32 / 16 bf16 / 32 i8

    # ---- VMEM budget (generation aware: ~100 MiB v5e/v6e, ~50 MiB v7x) -----
    vmem_limit = int(min(_vmem_capacity_bytes() * 0.78, 100 * 2**20))
    budget = (int(vmem_budget_bytes) if vmem_budget_bytes is not None
              else int(vmem_limit * 0.80))

    # ---- row tile: ~2 MiB x/out blocks, >= 2 grid steps (v7x: 2 TCs) -------
    if tile_rows is None:
        tm = max(pack, min(1024, (2 * 2**20) // max(1, H * isz)))
    else:
        tm = max(pack, tile_rows)
    tm = _round_up(min(tm, _round_up(rows, pack)), pack)
    if _cdiv(rows, tm) < 2 and rows > pack:
        tm = _round_up(_cdiv(rows, 2), pack)

    x2d = x.reshape(rows, H)          # free reshape, no HBM copy
    b2d = b.reshape(1, H)
    w_bufs = 1 if _SINGLE_BUFFER_OK else 2
    cparams = dict(vmem_limit_bytes=vmem_limit)

    # ---- path selection: resident full weight whenever it fits the budget --
    tm_full = None
    fixed = w_bufs * H * H * isz + 2 * H * isz            # weight + bias
    for cand in sorted({tm, 512, 256, 128, pack}, reverse=True):
        if cand > tm or cand < pack:
            continue
        cand = _round_up(cand, pack)
        if fixed + 4 * cand * H * isz <= budget:           # 2x x-in + 2x out
            tm_full = cand
            break

    if tm_full is not None:
        tm = tm_full
        num_i = _cdiv(rows, tm)
        out2d = pl.pallas_call(
            _resadd_full_kernel,
            out_shape=jax.ShapeDtypeStruct((rows, H), x.dtype),
            grid_spec=pltpu.PrefetchScalarGridSpec(
                num_scalar_prefetch=0,
                grid=(num_i,),
                in_specs=[
                    pl.BlockSpec((tm, H), lambda i: (i, 0)),       # x row tile
                    _spec((H, H), lambda i: (0, 0), single=True),  # weight
                    _spec((1, H), lambda i: (0, 0), single=True),  # bias
                ],
                out_specs=pl.BlockSpec((tm, H), lambda i: (i, 0)),
            ),
            compiler_params=pltpu.CompilerParams(
                dimension_semantics=("parallel",), **cparams),
        )(x2d, w, b2d)
        return out2d.reshape(B, S, H)

    # ---- N-tiled weight path (weight genuinely too large for VMEM) ---------
    if H % 128 != 0:
        # TODO(synk): pad H (and the W/b columns) to a 128 multiple instead of
        # refusing -- not reachable for real Conformer hidden sizes.
        raise NotImplementedError(
            "ResidualAdd N-tiled path requires H %% 128 == 0 (got H=%d)" % H)

    tn = None
    while tn is None:
        for cand_tn in (1024, 512, 256, 384, 128):          # prefer 256-multiples
            if H % cand_tn:
                continue
            need = (2 * tm * H * isz                        # full-K x block
                    + 2 * H * cand_tn * isz                 # weight column tile
                    + 2 * tm * cand_tn * isz                # out tile
                    + 2 * cand_tn * isz)                    # bias tile
            if need <= budget:
                tn = cand_tn
                break
        if tn is None:
            if tm <= pack:
                tn = 128                                    # best effort
            else:
                tm = max(pack, _round_up(tm // 2, pack))
    num_i = _cdiv(rows, tm)
    num_j = H // tn

    # Grid ordering: re-stream whichever operand costs fewer HBM bytes.
    j_inner = (num_i - 1) * H <= (num_j - 1) * rows
    if j_inner:        # x row block invariant over the inner (column) axis
        grid, col_axis = (num_i, num_j), 1
        row_of, col_of = (lambda a, b: a), (lambda a, b: b)
    else:              # weight column tile invariant over the inner (row) axis
        grid, col_axis = (num_j, num_i), 0
        row_of, col_of = (lambda a, b: b), (lambda a, b: a)
    x_map = lambda a, b: (row_of(a, b), 0)
    w_map = lambda a, b: (0, col_of(a, b))
    o_map = lambda a, b: (row_of(a, b), col_of(a, b))

    x_spec = _spec((tm, H), x_map, single=j_inner)
    w_spec = _spec((H, tn), w_map, single=not j_inner)
    b_spec = pl.BlockSpec((1, tn), w_map)
    o_spec = pl.BlockSpec((tm, tn), o_map)

    if _DYN_LANE_SLICE_OK:
        kernel = functools.partial(_resadd_ntiled_kernel,
                                   col_axis=col_axis, tn=tn)
        in_specs = [x_spec, w_spec, b_spec]
        args = (x2d, w, b2d)
    else:
        # TODO(synk): drop the duplicate x read once 128-aligned dynamic lane
        # slicing is available on this JAX/Mosaic version.
        kernel = _resadd_ntiled_dualx_kernel
        in_specs = [x_spec, pl.BlockSpec((tm, tn), o_map), w_spec, b_spec]
        args = (x2d, x2d, w, b2d)

    out2d = pl.pallas_call(
        kernel,
        out_shape=jax.ShapeDtypeStruct((rows, H), x.dtype),
        grid_spec=pltpu.PrefetchScalarGridSpec(
            num_scalar_prefetch=0,
            grid=grid,
            in_specs=in_specs,
            out_specs=o_spec,
        ),
        compiler_params=pltpu.CompilerParams(
            dimension_semantics=("parallel", "parallel"), **cparams),
    )(*args)
    return out2d.reshape(B, S, H)


# ----------------------------------------------------------------------------
# Self-test
# ----------------------------------------------------------------------------

def _check(x, w, b, atol, rtol, **kw):
    out = jax.block_until_ready(residual_add(x, w, b, **kw))
    assert out.shape == x.shape and out.dtype == x.dtype
    xf, wf, bf = (t.astype(jnp.float32) for t in (x, w, b))
    ref = xf + (jnp.dot(xf, wf) + bf)
    err = jnp.max(jnp.abs(out.astype(jnp.float32) - ref))
    assert jnp.allclose(out.astype(jnp.float32), ref, atol=atol, rtol=rtol), (
        f"mismatch: max abs err = {err}")
    return out


if __name__ == "__main__":
    key = jax.random.PRNGKey(0)
    kx, kw_, kb = jax.random.split(key, 3)

    # --- small Conformer-ish block: resident-weight path --------------------
    B, S, H = 2, 8, 256
    x = jax.random.normal(kx, (B, S, H), dtype=jnp.float32)
    w = jax.random.normal(kw_, (H, H), dtype=jnp.float32) * 0.02
    b = jax.random.normal(kb, (H,), dtype=jnp.float32) * 0.02
    _check(x, w, b, atol=2e-2, rtol=2e-2)

    # --- rows not a multiple of the row tile -> masked partial last tile ----
    B2, S2 = 3, 50
    x2 = jax.random.normal(kx, (B2, S2, H), dtype=jnp.float32)
    _check(x2, w, b, atol=2e-2, rtol=2e-2)

    # --- H = 1024 now stays on the resident-weight path (budget-driven) -----
    B3, S3, H3 = 2, 64, 1024
    x3 = jax.random.normal(kx, (B3, S3, H3), dtype=jnp.float32)
    w3 = jax.random.normal(kw_, (H3, H3), dtype=jnp.float32) * 0.02
    b3 = jax.random.normal(kb, (H3,), dtype=jnp.float32) * 0.02
    _check(x3, w3, b3, atol=2e-2, rtol=2e-2)

    # --- force the N-tiled weight path (tiny artificial VMEM budget) --------
    B4, S4, H4 = 2, 128, 512
    x4 = jax.random.normal(kx, (B4, S4, H4), dtype=jnp.float32)
    w4 = jax.random.normal(kw_, (H4, H4), dtype=jnp.float32) * 0.02
    b4 = jax.random.normal(kb, (H4,), dtype=jnp.float32) * 0.02
    _check(x4, w4, b4, atol=2e-2, rtol=2e-2, vmem_budget_bytes=1 << 20)

    # --- bf16 operands, f32 accumulation / residual -------------------------
    _check(x.astype(jnp.bfloat16), w.astype(jnp.bfloat16),
           b.astype(jnp.bfloat16), atol=5e-2, rtol=5e-2)

    print("KERNEL_OK")
</pallas_src>

<mosaic_0001>
module attributes {stable_mosaic.version = 11 : i64} {
  func.func @kern(%arg0: i32, %arg1: memref<8x128xf32, #tpu.memory_space<vmem>>, %arg2: memref<8x128xf32, #tpu.memory_space<vmem>>) attributes {dimension_semantics = [#tpu.dimension_semantics<arbitrary>], iteration_bounds = array<i64: 2>, scalar_prefetch = 0 : i64, scratch_operands = 0 : i64, tpu.core_type = #tpu.core_type<tc>, window_params = [{pipeline_mode = #tpu.pipeline_mode<synchronous>, transform_indices = @transform_0, window_bounds = array<i64: 8, 128>}, {transform_indices = @transform_1, window_bounds = array<i64: 8, 128>}]} {
    %c0 = arith.constant 0 : index
    %c0_0 = arith.constant 0 : index
    %0 = vector.load %arg1[%c0, %c0_0] : memref<8x128xf32, #tpu.memory_space<vmem>>, vector<8x128xf32>
    %cst = arith.constant 2.000000e+00 : f32
    %1 = vector.broadcast %cst : f32 to vector<8x128xf32>
    %2 = arith.mulf %0, %1 : vector<8x128xf32>
    %c0_1 = arith.constant 0 : index
    %c0_2 = arith.constant 0 : index
    %3 = vector.load %arg2[%c0_1, %c0_2] : memref<8x128xf32, #tpu.memory_space<vmem>>, vector<8x128xf32>
    tpu.vector_store %arg2[%c0_1, %c0_2], %2 {strides = array<i32>} : memref<8x128xf32, #tpu.memory_space<vmem>>, vector<8x128xf32>,
    return
  }
  func.func @transform_0(%arg0: i32) -> (i32, i32) {
    %c0_i32 = arith.constant 0 : i32
    %c0_i32_0 = arith.constant 0 : i32
    %c0_i32_1 = arith.constant 0 : i32
    return %c0_i32, %c0_i32_0 : i32, i32
  }
  func.func @transform_1(%arg0: i32) -> (i32, i32) {
    %c0_i32 = arith.constant 0 : i32
    %c0_i32_0 = arith.constant 0 : i32
    return %arg0, %c0_i32 : i32, i32
  }
}

module attributes {stable_mosaic.version = 11 : i64} {
  func.func @kern(%arg0: i32, %arg1: memref<8x256xf32, #tpu.memory_space<vmem>>, %arg2: memref<8x128xf32, #tpu.memory_space<vmem>>) attributes {dimension_semantics = [#tpu.dimension_semantics<arbitrary>], iteration_bounds = array<i64: 2>, scalar_prefetch = 0 : i64, scratch_operands = 0 : i64, tpu.core_type = #tpu.core_type<tc>, window_params = [{pipeline_mode = #tpu.pipeline_mode<synchronous>, transform_indices = @transform_0, window_bounds = array<i64: 8, 256>}, {transform_indices = @transform_1, window_bounds = array<i64: 8, 128>}]} {
    %c128_i32 = arith.constant 128 : i32
    %0 = arith.muli %arg0, %c128_i32 : i32
    %1 = tpu.assume_multiple %0, 128 : i32
    %c0 = arith.constant 0 : index
    %2 = arith.index_cast %1 : i32 to index
    %3 = vector.load %arg1[%c0, %2] : memref<8x256xf32, #tpu.memory_space<vmem>>, vector<8x128xf32>
    %c0_0 = arith.constant 0 : index
    %c0_1 = arith.constant 0 : index
    %4 = vector.load %arg2[%c0_0, %c0_1] : memref<8x128xf32, #tpu.memory_space<vmem>>, vector<8x128xf32>
    tpu.vector_store %arg2[%c0_0, %c0_1], %3 {strides = array<i32>} : memref<8x128xf32, #tpu.memory_space<vmem>>, vector<8x128xf32>,
    return
  }
  func.func @transform_0(%arg0: i32) -> (i32, i32) {
    %c0_i32 = arith.constant 0 : i32
    %c0_i32_0 = arith.constant 0 : i32
    %c0_i32_1 = arith.constant 0 : i32
    return %c0_i32, %c0_i32_0 : i32, i32
  }
  func.func @transform_1(%arg0: i32) -> (i32, i32) {
    %c0_i32 = arith.constant 0 : i32
    %c0_i32_0 = arith.constant 0 : i32
    return %c0_i32, %arg0 : i32, i32
  }
}

module attributes {stable_mosaic.version = 11 : i64} {
  func.func @_resadd_full_kernel(%arg0: i32, %arg1: memref<8x256xf32, #tpu.memory_space<vmem>>, %arg2: memref<256x256xf32, #tpu.memory_space<vmem>>, %arg3: memref<1x256xf32, #tpu.memory_space<vmem>>, %arg4: memref<8x256xf32, #tpu.memory_space<vmem>>) attributes {dimension_semantics = [#tpu.dimension_semantics<parallel>], iteration_bounds = array<i64: 2>, scalar_prefetch = 0 : i64, scratch_operands = 0 : i64, tpu.core_type = #tpu.core_type<tc>, window_params = [{transform_indices = @transform_0, window_bounds = array<i64: 8, 256>}, {pipeline_mode = #tpu.pipeline_mode<synchronous>, transform_indices = @transform_1, window_bounds = array<i64: 256, 256>}, {pipeline_mode = #tpu.pipeline_mode<synchronous>, transform_indices = @transform_2, window_bounds = array<i64: 1, 256>}, {transform_indices = @transform_3, window_bounds = array<i64: 8, 256>}]} {
    %c0 = arith.constant 0 : index
    %c0_0 = arith.constant 0 : index
    %0 = vector.load %arg1[%c0, %c0_0] : memref<8x256xf32, #tpu.memory_space<vmem>>, vector<8x256xf32>
    %c0_1 = arith.constant 0 : index
    %c0_2 = arith.constant 0 : index
    %1 = vector.load %arg2[%c0_1, %c0_2] : memref<256x256xf32, #tpu.memory_space<vmem>>, vector<256x256xf32>
    %cst = arith.constant dense<0.000000e+00> : vector<8x256xf32>
    %2 = tpu.matmul %0, %1, %cst {dimension_numbers = #tpu.dot_dimension_numbers<[1], [0], [0], [1], [0, 0, 1, 1], [], []>} : vector<8x256xf32>, vector<256x256xf32>, vector<8x256xf32> -> vector<8x256xf32>
    %c0_3 = arith.constant 0 : index
    %c0_4 = arith.constant 0 : index
    %3 = vector.load %arg3[%c0_3, %c0_4] : memref<1x256xf32, #tpu.memory_space<vmem>>, vector<1x256xf32>
    %4 = vector.broadcast %3 : vector<1x256xf32> to vector<8x256xf32>
    %5 = arith.addf %2, %4 : vector<8x256xf32>
    %6 = arith.addf %0, %5 : vector<8x256xf32>
    %c0_5 = arith.constant 0 : index
    %c0_6 = arith.constant 0 : index
    %7 = vector.load %arg4[%c0_5, %c0_6] : memref<8x256xf32, #tpu.memory_space<vmem>>, vector<8x256xf32>
    tpu.vector_store %arg4[%c0_5, %c0_6], %6 {strides = array<i32>} : memref<8x256xf32, #tpu.memory_space<vmem>>, vector<8x256xf32>,
    return
  }
  func.func @transform_0(%arg0: i32) -> (i32, i32) {
    %c0_i32 = arith.constant 0 : i32
    %c0_i32_0 = arith.constant 0 : i32
    return %arg0, %c0_i32 : i32, i32
  }
  func.func @transform_1(%arg0: i32) -> (i32, i32) {
    %c0_i32 = arith.constant 0 : i32
    %c0_i32_0 = arith.constant 0 : i32
    %c0_i32_1 = arith.constant 0 : i32
    return %c0_i32, %c0_i32_0 : i32, i32
  }
  func.func @transform_2(%arg0: i32) -> (i32, i32) {
    %c0_i32 = arith.constant 0 : i32
    %c0_i32_0 = arith.constant 0 : i32
    %c0_i32_1 = arith.constant 0 : i32
    return %c0_i32, %c0_i32_0 : i32, i32
  }
  func.func @transform_3(%arg0: i32) -> (i32, i32) {
    %c0_i32 = arith.constant 0 : i32
    %c0_i32_0 = arith.constant 0 : i32
    return %arg0, %c0_i32 : i32, i32
  }
}

</mosaic_0001>

<llo_original>
// kernel: tpu_custom_call.1
$region0: #{tpu_custom_call.1}
  #allocation0 [shape = 'u32[]', space=smem, size = 0x4, offset = 0x4, fixed_abs, tag = 'smem constant byte address 0x4 - core index']
  #allocation1 [shape = 'u32[144,128]{1,0:T(1,128)}', space=vmem, size = 0x12000, scoped, tag = 'internal scratch']
  %s0 = inlined_call_operand.hbm [shape: f32[8,128], index: 0, kind: input, shape index: {}]
  %s1 = inlined_call_operand.hbm [shape: f32[16,128], index: 1, kind: output, shape index: {}]
  %s2 = sld [smem:[#allocation0]]
  $region41: #{tpu_custom_call.1} parent=0
    _
  %s4 = ssub.s32 1, %s2
  %s5 = scalar_select 0, %s4, %s2
  $region1: #{tpu_custom_call.1} parent=0
    #allocation2 [shape = 'u8[4096]{0}', space=vmem, size = 0x1000, scoped, tag = 'input window, operand 0, single buffered']
    #allocation3 [shape = 's32[2]{0}', space=sflag, size = 0x8, scoped, tag = 'scoped memory for tpu_custom_call.1']
    #allocation4 [shape = 's32[2]{0}', space=sflag, size = 0x8, scoped, tag = 'scoped memory for tpu_custom_call.1']
    #allocation5 [shape = 'u8[8192]{0}', space=vmem, size = 0x2000, scoped, tag = 'output window, operand 0']
    %6 = vsyncpa [#allocation3], 0
    %7 = vsyncpa [#allocation4], 0
    %s8 = scalar_lea.sflag [#allocation4], 1
    %9 = vsyncpa %s8, 0
    loop: start=0, step=1, limit=4
    $region2: #{tpu_custom_call.1} parent=1 // loop_pre_header
      _
    $region3: #{tpu_custom_call.1} parent=1 // loop_header
      %s11 = sphi 0, %s15
      %p12 = scmp.ge.s32.totalorder %s11, 4
      %s19 = sphi 0, %s19
      %s21 = sphi 0, %s19
      %s22 = sphi 0, %s21
      %s36 = sphi 0, %s22
      %s42 = sphi 0, %s44
      %s45 = sphi 0, %s42
      %s46 = sphi 0, %s45
      %s62 = sphi 0, %s46
    $region4: #{tpu_custom_call.1} parent=1 // loop_header_branch
      %14 = sbr.rel (%p12) target = $region8
    $region5: #{tpu_custom_call.1} parent=1 // loop_body
      %s16 = ssub.s32 %s11, 1
      %s17 = ssub.s32 %s11, 2
      %s18 = sadd.s32 %s11, 1
      %s20 = sadd.s32 %s19, 1
      %p23 = scmp.eq.s32.totalorder %s11, 1
      %p24 = scmp.ne.s32.totalorder %s19, %s21
      %p25 = scmp.eq.s32.totalorder %s11, 0
      %p26 = por %p24, %p25
      %p27 = scmp.ne.s32.totalorder %s19, %s21
      %p28 = scmp.eq.s32.totalorder %s16, 1
      %p29 = por %p27, %p28
      %p30 = scmp.ne.s32.totalorder %s21, %s22
      %p31 = scmp.eq.s32.totalorder %s16, 0
      %p32 = por %p30, %p31
      %p33 = scmp.ne.s32.totalorder %s21, %s22
      %p34 = scmp.eq.s32.totalorder %s17, 1
      %p35 = por %p33, %p34
      %p37 = scmp.ne.s32.totalorder %s22, %s36
      %p38 = scmp.eq.s32.totalorder %s17, 0
      %p39 = por %p37, %p38
      %s40 = ssub.s32 %s11, %s18
      %p41 = scmp.eq.s32.totalorder %s40, 0
      %s43 = sadd.s32 %s42, 1
      %s44 = scalar_select %p41, %s42, %s43
      %p47 = pneg %p41
      %p48 = scmp.eq.s32.totalorder %s11, 1
      %p49 = por %p47, %p48
      %p50 = scmp.ne.s32.totalorder %s42, %s45
      %p51 = scmp.eq.s32.totalorder %s11, 0
      %p52 = por %p50, %p51
      %p53 = scmp.ne.s32.totalorder %s42, %s45
      %p54 = scmp.eq.s32.totalorder %s16, 1
      %p55 = por %p53, %p54
      %p56 = scmp.ne.s32.totalorder %s45, %s46
      %p57 = scmp.eq.s32.totalorder %s16, 0
      %p58 = por %p56, %p57
      %p59 = scmp.ne.s32.totalorder %s45, %s46
      %p60 = scmp.eq.s32.totalorder %s17, 1
      %p61 = por %p59, %p60
      %p63 = scmp.ne.s32.totalorder %s46, %s62
      %p64 = scmp.eq.s32.totalorder %s17, 0
      %p65 = por %p63, %p64
      %p66 = scmp.le.s32.totalorder 1, %s11
      %p67 = scmp.lt.s32.totalorder %s11, 3
      %p68 = pnand %p66, %p67
      %p69 = pneg %p68
      // Predicated region
      $region9: #{tpu_custom_call.1} parent=5 // pred_check
        _
      $region10: #{tpu_custom_call.1} parent=5 // pred_check_branch
        %71 = sbr.rel (%p68) target = $region12
      $region11: #{tpu_custom_call.1} parent=5 // pred_region
        %s72 = ssub.s32 %s11, 1
        // Predicated region
        $region13: #{tpu_custom_call.1} parent=11 // pred_check
          %p73 = pneg %p32
        $region14: #{tpu_custom_call.1} parent=11 // pred_check_branch
          %75 = sbr.rel (%p73) target = $region16
        $region15: #{tpu_custom_call.1} parent=11 // pred_region
          %s77 = ssub.s32 128, 128
          %78 = vsyncadd [#allocation3], %s77
          %s80 = sshll.u32 [#allocation2], 4
          %s81 = int_to_ptr.vmem [resolvable:$true] %s80
          %83 = dma.hbm_to_vmem [thread:$0]  %s0, 128, %s81, [#allocation3]
        $region16: #{tpu_custom_call.1} parent=11 // pred_fallthru
          _
      $region12: #{tpu_custom_call.1} parent=5 // pred_fallthru
        _
      %p84 = scmp.lt.s32.totalorder %s11, 2
      // Predicated region
      $region17: #{tpu_custom_call.1} parent=5 // pred_check
        %p85 = pneg %p84
      $region18: #{tpu_custom_call.1} parent=5 // pred_check_branch
        %87 = sbr.rel (%p85) target = $region20
      $region19: #{tpu_custom_call.1} parent=5 // pred_region
        _
      $region20: #{tpu_custom_call.1} parent=5 // pred_fallthru
        _
      %p88 = scmp.le.s32.totalorder 1, %s11
      %p89 = scmp.lt.s32.totalorder %s11, 3
      %p90 = pnand %p88, %p89
      %p91 = pneg %p90
      // Predicated region
      $region21: #{tpu_custom_call.1} parent=5 // pred_check
        _
      $region22: #{tpu_custom_call.1} parent=5 // pred_check_branch
        %93 = sbr.rel (%p90) target = $region24
      $region23: #{tpu_custom_call.1} parent=5 // pred_region
        %s94 = ssub.s32 %s11, 1
        // Predicated region
        $region25: #{tpu_custom_call.1} parent=23 // pred_check
          %p95 = pneg %p32
        $region26: #{tpu_custom_call.1} parent=23 // pred_check_branch
          %97 = sbr.rel (%p95) target = $region28
        $region27: #{tpu_custom_call.1} parent=23 // pred_region
          %98 = dma.done [#allocation3], 128
        $region28: #{tpu_custom_call.1} parent=23 // pred_fallthru
          _
        %p99 = pneg %p32
        %p100 = pneg %p29
        %p101 = pneg %p58
        %p102 = pneg %p55
        %s103 = sand.u32 %s45, 1
        %s104 = scalar_lea.sflag [#allocation4], %s103
        %s105 = sand.u32 %s45, 1
        %s106 = smul.addr %s105, 8
        %s107 = scalar_lea.vmem [#allocation5], %s106
        %v108 = vld [vmem:[#allocation2] sm:$0xff]
        %v109 = vmul.f32 %v108, 2.0
        %110 = vst [vmem:[%s107] sm:$0xff] %v109
        %s111 = sand.u32 %s45, 1
        %s112 = scalar_lea.sflag [#allocation4], %s111
        %s113 = sand.u32 %s45, 1
        %s114 = smul.addr %s113, 8
        %s115 = scalar_lea.vmem [#allocation5], %s114
        // Predicated region
        $region29: #{tpu_custom_call.1} parent=23 // pred_check
          %p116 = pneg %p55
        $region30: #{tpu_custom_call.1} parent=23 // pred_check_branch
          %118 = sbr.rel (%p116) target = $region32
        $region31: #{tpu_custom_call.1} parent=23 // pred_region
          %s120 = ssub.s32 128, 128
          %121 = vsyncadd %s112, %s120
          %s122 = smul.addr %s16, 128
          %s123 = scalar_lea.hbm %s1, %s122
          %s125 = sshll.u32 %s115, 4
          %s126 = int_to_ptr.vmem [resolvable:$true] %s125
          %128 = dma.vmem_to_hbm [thread:$0]  %s126, 128, %s123, %s112
        $region32: #{tpu_custom_call.1} parent=23 // pred_fallthru
          _
      $region24: #{tpu_custom_call.1} parent=5 // pred_fallthru
        _
      %p129 = scmp.le.s32.totalorder 2, %s11
      // Predicated region
      $region33: #{tpu_custom_call.1} parent=5 // pred_check
        %p130 = pneg %p129
      $region34: #{tpu_custom_call.1} parent=5 // pred_check_branch
        %132 = sbr.rel (%p130) target = $region36
      $region35: #{tpu_custom_call.1} parent=5 // pred_region
        %s133 = ssub.s32 %s11, 2
        // Predicated region
        $region37: #{tpu_custom_call.1} parent=35 // pred_check
          %p134 = pneg %p61
        $region38: #{tpu_custom_call.1} parent=35 // pred_check_branch
          %136 = sbr.rel (%p134) target = $region40
        $region39: #{tpu_custom_call.1} parent=35 // pred_region
          %s137 = sand.u32 %s46, 1
          %s138 = scalar_lea.sflag [#allocation4], %s137
          %s139 = sand.u32 %s46, 1
          %s140 = smul.addr %s139, 8
          %s141 = scalar_lea.vmem [#allocation5], %s140
          %142 = dma.done %s138, 128
        $region40: #{tpu_custom_call.1} parent=35 // pred_fallthru
          _
      $region36: #{tpu_custom_call.1} parent=5 // pred_fallthru
        _
    $region6: #{tpu_custom_call.1} parent=1 // loop_footer
      %s15 = sadd.s32 1, %s11
    $region7: #{tpu_custom_call.1} parent=1 // loop_footer_branch
      %10 = sbr.rel target = $region3
    $region8: #{tpu_custom_call.1} parent=1 // loop_exit
      _
    %143 = vsyncpa [#allocation3], 1
    %s144 = scalar_lea.sflag [#allocation3], 1
    %145 = vsyncpa %s144, 1
    %146 = vsyncpa [#allocation4], 1
    %s147 = scalar_lea.sflag [#allocation4], 1
    %148 = vsyncpa %s147, 1

// kernel: tpu_custom_call.1
$region0: #{tpu_custom_call.1}
  #allocation0 [shape = 'u32[]', space=smem, size = 0x4, offset = 0x4, fixed_abs, tag = 'smem constant byte address 0x4 - core index']
  #allocation1 [shape = 'u32[144,128]{1,0:T(1,128)}', space=vmem, size = 0x12000, scoped, tag = 'internal scratch']
  %s0 = inlined_call_operand.hbm [shape: f32[8,256], index: 0, kind: input, shape index: {}]
  %s1 = inlined_call_operand.hbm [shape: f32[8,256], index: 1, kind: output, shape index: {}]
  %s2 = sld [smem:[#allocation0]]
  $region41: #{tpu_custom_call.1} parent=0
    _
  %s4 = ssub.s32 1, %s2
  %s5 = scalar_select 0, %s4, %s2
  $region1: #{tpu_custom_call.1} parent=0
    #allocation2 [shape = 'u8[8192]{0}', space=vmem, size = 0x2000, scoped, tag = 'input window, operand 0, single buffered']
    #allocation3 [shape = 's32[2]{0}', space=sflag, size = 0x8, scoped, tag = 'scoped memory for tpu_custom_call.1']
    #allocation4 [shape = 's32[2]{0}', space=sflag, size = 0x8, scoped, tag = 'scoped memory for tpu_custom_call.1']
    #allocation5 [shape = 'u8[8192]{0}', space=vmem, size = 0x2000, scoped, tag = 'output window, operand 0']
    %6 = vsyncpa [#allocation3], 0
    %7 = vsyncpa [#allocation4], 0
    %s8 = scalar_lea.sflag [#allocation4], 1
    %9 = vsyncpa %s8, 0
    loop: start=0, step=1, limit=4
    $region2: #{tpu_custom_call.1} parent=1 // loop_pre_header
      _
    $region3: #{tpu_custom_call.1} parent=1 // loop_header
      %s11 = sphi 0, %s15
      %p12 = scmp.ge.s32.totalorder %s11, 4
      %s19 = sphi 0, %s19
      %s21 = sphi 0, %s19
      %s22 = sphi 0, %s21
      %s36 = sphi 0, %s22
      %s42 = sphi 0, %s44
      %s45 = sphi 0, %s42
      %s46 = sphi 0, %s45
      %s62 = sphi 0, %s46
    $region4: #{tpu_custom_call.1} parent=1 // loop_header_branch
      %14 = sbr.rel (%p12) target = $region8
    $region5: #{tpu_custom_call.1} parent=1 // loop_body
      %s16 = ssub.s32 %s11, 1
      %s17 = ssub.s32 %s11, 2
      %s18 = sadd.s32 %s11, 1
      %s20 = sadd.s32 %s19, 1
      %p23 = scmp.eq.s32.totalorder %s11, 1
      %p24 = scmp.ne.s32.totalorder %s19, %s21
      %p25 = scmp.eq.s32.totalorder %s11, 0
      %p26 = por %p24, %p25
      %p27 = scmp.ne.s32.totalorder %s19, %s21
      %p28 = scmp.eq.s32.totalorder %s16, 1
      %p29 = por %p27, %p28
      %p30 = scmp.ne.s32.totalorder %s21, %s22
      %p31 = scmp.eq.s32.totalorder %s16, 0
      %p32 = por %p30, %p31
      %p33 = scmp.ne.s32.totalorder %s21, %s22
      %p34 = scmp.eq.s32.totalorder %s17, 1
      %p35 = por %p33, %p34
      %p37 = scmp.ne.s32.totalorder %s22, %s36
      %p38 = scmp.eq.s32.totalorder %s17, 0
      %p39 = por %p37, %p38
      %s40 = ssub.s32 %s11, %s18
      %p41 = scmp.eq.s32.totalorder %s40, 0
      %s43 = sadd.s32 %s42, 1
      %s44 = scalar_select %p41, %s42, %s43
      %p47 = pneg %p41
      %p48 = scmp.eq.s32.totalorder %s11, 1
      %p49 = por %p47, %p48
      %p50 = scmp.ne.s32.totalorder %s42, %s45
      %p51 = scmp.eq.s32.totalorder %s11, 0
      %p52 = por %p50, %p51
      %p53 = scmp.ne.s32.totalorder %s42, %s45
      %p54 = scmp.eq.s32.totalorder %s16, 1
      %p55 = por %p53, %p54
      %p56 = scmp.ne.s32.totalorder %s45, %s46
      %p57 = scmp.eq.s32.totalorder %s16, 0
      %p58 = por %p56, %p57
      %p59 = scmp.ne.s32.totalorder %s45, %s46
      %p60 = scmp.eq.s32.totalorder %s17, 1
      %p61 = por %p59, %p60
      %p63 = scmp.ne.s32.totalorder %s46, %s62
      %p64 = scmp.eq.s32.totalorder %s17, 0
      %p65 = por %p63, %p64
      %p66 = scmp.le.s32.totalorder 1, %s11
      %p67 = scmp.lt.s32.totalorder %s11, 3
      %p68 = pnand %p66, %p67
      %p69 = pneg %p68
      // Predicated region
      $region9: #{tpu_custom_call.1} parent=5 // pred_check
        _
      $region10: #{tpu_custom_call.1} parent=5 // pred_check_branch
        %71 = sbr.rel (%p68) target = $region12
      $region11: #{tpu_custom_call.1} parent=5 // pred_region
        %s72 = ssub.s32 %s11, 1
        // Predicated region
        $region13: #{tpu_custom_call.1} parent=11 // pred_check
          %p73 = pneg %p32
        $region14: #{tpu_custom_call.1} parent=11 // pred_check_branch
          %75 = sbr.rel (%p73) target = $region16
        $region15: #{tpu_custom_call.1} parent=11 // pred_region
          %s77 = ssub.s32 256, 256
          %78 = vsyncadd [#allocation3], %s77
          %s80 = sshll.u32 [#allocation2], 4
          %s81 = int_to_ptr.vmem [resolvable:$true] %s80
          %83 = dma.hbm_to_vmem [thread:$0]  %s0, 256, %s81, [#allocation3]
        $region16: #{tpu_custom_call.1} parent=11 // pred_fallthru
          _
      $region12: #{tpu_custom_call.1} parent=5 // pred_fallthru
        _
      %p84 = scmp.lt.s32.totalorder %s11, 2
      // Predicated region
      $region17: #{tpu_custom_call.1} parent=5 // pred_check
        %p85 = pneg %p84
      $region18: #{tpu_custom_call.1} parent=5 // pred_check_branch
        %87 = sbr.rel (%p85) target = $region20
      $region19: #{tpu_custom_call.1} parent=5 // pred_region
        _
      $region20: #{tpu_custom_call.1} parent=5 // pred_fallthru
        _
      %p88 = scmp.le.s32.totalorder 1, %s11
      %p89 = scmp.lt.s32.totalorder %s11, 3
      %p90 = pnand %p88, %p89
      %p91 = pneg %p90
      // Predicated region
      $region21: #{tpu_custom_call.1} parent=5 // pred_check
        _
      $region22: #{tpu_custom_call.1} parent=5 // pred_check_branch
        %93 = sbr.rel (%p90) target = $region24
      $region23: #{tpu_custom_call.1} parent=5 // pred_region
        %s94 = ssub.s32 %s11, 1
        // Predicated region
        $region25: #{tpu_custom_call.1} parent=23 // pred_check
          %p95 = pneg %p32
        $region26: #{tpu_custom_call.1} parent=23 // pred_check_branch
          %97 = sbr.rel (%p95) target = $region28
        $region27: #{tpu_custom_call.1} parent=23 // pred_region
          %98 = dma.done [#allocation3], 256
        $region28: #{tpu_custom_call.1} parent=23 // pred_fallthru
          _
        %p99 = pneg %p32
        %p100 = pneg %p29
        %p101 = pneg %p58
        %p102 = pneg %p55
        %s103 = sand.u32 %s45, 1
        %s104 = scalar_lea.sflag [#allocation4], %s103
        %s105 = sand.u32 %s45, 1
        %s106 = smul.addr %s105, 8
        %s107 = scalar_lea.vmem [#allocation5], %s106
        %s108 = smul.u32 %s16, 128
        %s109 = sshra.s32 %s108, 7
        %s110 = sand.u32 %s108, 127
        %s111 = smul.addr %s109, 8
        %s112 = scalar_lea.vmem [#allocation2], %s111
        %v113 = vld [vmem:[%s112] sm:$0xff]
        %114 = vst [vmem:[%s107] sm:$0xff] %v113
        %s115 = sand.u32 %s45, 1
        %s116 = scalar_lea.sflag [#allocation4], %s115
        %s117 = sand.u32 %s45, 1
        %s118 = smul.addr %s117, 8
        %s119 = scalar_lea.vmem [#allocation5], %s118
        // Predicated region
        $region29: #{tpu_custom_call.1} parent=23 // pred_check
          %p120 = pneg %p55
        $region30: #{tpu_custom_call.1} parent=23 // pred_check_branch
          %122 = sbr.rel (%p120) target = $region32
        $region31: #{tpu_custom_call.1} parent=23 // pred_region
          %s124 = ssub.s32 128, 128
          %125 = vsyncadd %s116, %s124
          %s126 = smul.addr %s16, 128
          %s127 = scalar_lea.hbm %s1, %s126
          %s129 = sshll.u32 %s119, 4
          %s130 = int_to_ptr.vmem [resolvable:$true] %s129
          %132 = dma.vmem_to_hbm [thread:$0]  %s130, 128, %s127, %s116
        $region32: #{tpu_custom_call.1} parent=23 // pred_fallthru
          _
      $region24: #{tpu_custom_call.1} parent=5 // pred_fallthru
        _
      %p133 = scmp.le.s32.totalorder 2, %s11
      // Predicated region
      $region33: #{tpu_custom_call.1} parent=5 // pred_check
        %p134 = pneg %p133
      $region34: #{tpu_custom_call.1} parent=5 // pred_check_branch
        %136 = sbr.rel (%p134) target = $region36
      $region35: #{tpu_custom_call.1} parent=5 // pred_region
        %s137 = ssub.s32 %s11, 2
        // Predicated region
        $region37: #{tpu_custom_call.1} parent=35 // pred_check
          %p138 = pneg %p61
        $region38: #{tpu_custom_call.1} parent=35 // pred_check_branch
          %140 = sbr.rel (%p138) target = $region40
        $region39: #{tpu_custom_call.1} parent=35 // pred_region
          %s141 = sand.u32 %s46, 1
          %s142 = scalar_lea.sflag [#allocation4], %s141
          %s143 = sand.u32 %s46, 1
          %s144 = smul.addr %s143, 8
          %s145 = scalar_lea.vmem [#allocation5], %s144
          %146 = dma.done %s142, 128
        $region40: #{tpu_custom_call.1} parent=35 // pred_fallthru
          _
      $region36: #{tpu_custom_call.1} parent=5 // pred_fallthru
        _
    $region6: #{tpu_custom_call.1} parent=1 // loop_footer
      %s15 = sadd.s32 1, %s11
    $region7: #{tpu_custom_call.1} parent=1 // loop_footer_branch
      %10 = sbr.rel target = $region3
    $region8: #{tpu_custom_call.1} parent=1 // loop_exit
      _
    %147 = vsyncpa [#allocation3], 1
    %s148 = scalar_lea.sflag [#allocation3], 1
    %149 = vsyncpa %s148, 1
    %150 = vsyncpa [#allocation4], 1
    %s151 = scalar_lea.sflag [#allocation4], 1
    %152 = vsyncpa %s151, 1

// kernel: residual_add.1
$region0: #{residual_add.1}
  #allocation0 [shape = 'u32[]', space=smem, size = 0x4, offset = 0x4, fixed_abs, tag = 'smem constant byte address 0x4 - core index']
  #allocation1 [shape = 'u32[144,128]{1,0:T(1,128)}', space=vmem, size = 0x12000, scoped, tag = 'internal scratch']
  %s0 = inlined_call_operand.hbm [shape: f32[16,256], index: 0, kind: input, shape index: {}]
  %s1 = inlined_call_operand.hbm [shape: f32[256,256], index: 1, kind: input, shape index: {}]
  %s2 = inlined_call_operand.vmem [shape: f32[1,256], index: 2, kind: input, shape index: {}]
  %s3 = inlined_call_operand.hbm [shape: f32[16,256], index: 3, kind: output, shape index: {}]
  %s4 = sld [smem:[#allocation0]]
  $region53: #{residual_add.1} parent=0
    _
  %s6 = ssub.s32 1, %s4
  %s7 = scalar_select 0, %s6, %s4
  $region1: #{residual_add.1} parent=0
    #allocation2 [shape = 'u8[16384]{0}', space=vmem, size = 0x4000, scoped, tag = 'input window, operand 0']
    #allocation3 [shape = 's32[2]{0}', space=sflag, size = 0x8, scoped, tag = 'scoped memory for residual_add.1']
    #allocation4 [shape = 's32[2]{0}', space=sflag, size = 0x8, scoped, tag = 'scoped memory for residual_add.1']
    #allocation5 [shape = 'u8[262144]{0}', space=vmem, size = 0x40000, scoped, tag = 'input window, operand 1, single buffered']
    #allocation6 [shape = 's32[1]{0}', space=sflag, size = 0x4, scoped, tag = 'scoped memory for residual_add.1']
    #allocation7 [shape = 'u8[16384]{0}', space=vmem, size = 0x4000, scoped, tag = 'output window, operand 0']
    %8 = vsyncpa [#allocation3], 0
    %s9 = scalar_lea.sflag [#allocation3], 1
    %10 = vsyncpa %s9, 0
    %11 = vsyncpa [#allocation6], 0
    %12 = vsyncpa [#allocation4], 0
    %s13 = scalar_lea.sflag [#allocation4], 1
    %14 = vsyncpa %s13, 0
    loop: start=0, step=1, limit=4
    $region2: #{residual_add.1} parent=1 // loop_pre_header
      _
    $region3: #{residual_add.1} parent=1 // loop_header
      %s16 = sphi 0, %s20
      %p17 = scmp.ge.s32.totalorder %s16, 4
      %s26 = sphi 0, %s28
      %s29 = sphi 0, %s26
      %s30 = sphi 0, %s29
      %s46 = sphi 0, %s30
      %s50 = sphi 0, %s50
      %s52 = sphi 0, %s50
      %s53 = sphi 0, %s52
      %s67 = sphi 0, %s53
      %s71 = sphi 0, %s71
      %s73 = sphi 0, %s71
      %s74 = sphi 0, %s73
      %s88 = sphi 0, %s74
      %s94 = sphi 0, %s96
      %s97 = sphi 0, %s94
      %s98 = sphi 0, %s97
      %s114 = sphi 0, %s98
    $region4: #{residual_add.1} parent=1 // loop_header_branch
      %19 = sbr.rel (%p17) target = $region8
    $region5: #{residual_add.1} parent=1 // loop_body
      %s21 = ssub.s32 %s16, 1
      %s22 = ssub.s32 %s16, 2
      %s23 = sadd.s32 %s16, 1
      %s24 = ssub.s32 %s16, %s23
      %p25 = scmp.eq.s32.totalorder %s24, 0
      %s27 = sadd.s32 %s26, 1
      %s28 = scalar_select %p25, %s26, %s27
      %p31 = pneg %p25
      %p32 = scmp.eq.s32.totalorder %s16, 1
      %p33 = por %p31, %p32
      %p34 = scmp.ne.s32.totalorder %s26, %s29
      %p35 = scmp.eq.s32.totalorder %s16, 0
      %p36 = por %p34, %p35
      %p37 = scmp.ne.s32.totalorder %s26, %s29
      %p38 = scmp.eq.s32.totalorder %s21, 1
      %p39 = por %p37, %p38
      %p40 = scmp.ne.s32.totalorder %s29, %s30
      %p41 = scmp.eq.s32.totalorder %s21, 0
      %p42 = por %p40, %p41
      %p43 = scmp.ne.s32.totalorder %s29, %s30
      %p44 = scmp.eq.s32.totalorder %s22, 1
      %p45 = por %p43, %p44
      %p47 = scmp.ne.s32.totalorder %s30, %s46
      %p48 = scmp.eq.s32.totalorder %s22, 0
      %p49 = por %p47, %p48
      %s51 = sadd.s32 %s50, 1
      %p54 = scmp.eq.s32.totalorder %s16, 1
      %p55 = scmp.ne.s32.totalorder %s50, %s52
      %p56 = scmp.eq.s32.totalorder %s16, 0
      %p57 = por %p55, %p56
      %p58 = scmp.ne.s32.totalorder %s50, %s52
      %p59 = scmp.eq.s32.totalorder %s21, 1
      %p60 = por %p58, %p59
      %p61 = scmp.ne.s32.totalorder %s52, %s53
      %p62 = scmp.eq.s32.totalorder %s21, 0
      %p63 = por %p61, %p62
      %p64 = scmp.ne.s32.totalorder %s52, %s53
      %p65 = scmp.eq.s32.totalorder %s22, 1
      %p66 = por %p64, %p65
      %p68 = scmp.ne.s32.totalorder %s53, %s67
      %p69 = scmp.eq.s32.totalorder %s22, 0
      %p70 = por %p68, %p69
      %s72 = sadd.s32 %s71, 1
      %p75 = scmp.eq.s32.totalorder %s16, 1
      %p76 = scmp.ne.s32.totalorder %s71, %s73
      %p77 = scmp.eq.s32.totalorder %s16, 0
      %p78 = por %p76, %p77
      %p79 = scmp.ne.s32.totalorder %s71, %s73
      %p80 = scmp.eq.s32.totalorder %s21, 1
      %p81 = por %p79, %p80
      %p82 = scmp.ne.s32.totalorder %s73, %s74
      %p83 = scmp.eq.s32.totalorder %s21, 0
      %p84 = por %p82, %p83
      %p85 = scmp.ne.s32.totalorder %s73, %s74
      %p86 = scmp.eq.s32.totalorder %s22, 1
      %p87 = por %p85, %p86
      %p89 = scmp.ne.s32.totalorder %s74, %s88
      %p90 = scmp.eq.s32.totalorder %s22, 0
      %p91 = por %p89, %p90
      %s92 = ssub.s32 %s16, %s23
      %p93 = scmp.eq.s32.totalorder %s92, 0
      %s95 = sadd.s32 %s94, 1
      %s96 = scalar_select %p93, %s94, %s95
      %p99 = pneg %p93
      %p100 = scmp.eq.s32.totalorder %s16, 1
      %p101 = por %p99, %p100
      %p102 = scmp.ne.s32.totalorder %s94, %s97
      %p103 = scmp.eq.s32.totalorder %s16, 0
      %p104 = por %p102, %p103
      %p105 = scmp.ne.s32.totalorder %s94, %s97
      %p106 = scmp.eq.s32.totalorder %s21, 1
      %p107 = por %p105, %p106
      %p108 = scmp.ne.s32.totalorder %s97, %s98
      %p109 = scmp.eq.s32.totalorder %s21, 0
      %p110 = por %p108, %p109
      %p111 = scmp.ne.s32.totalorder %s97, %s98
      %p112 = scmp.eq.s32.totalorder %s22, 1
      %p113 = por %p111, %p112
      %p115 = scmp.ne.s32.totalorder %s98, %s114
      %p116 = scmp.eq.s32.totalorder %s22, 0
      %p117 = por %p115, %p116
      %p118 = scmp.le.s32.totalorder 1, %s16
      %p119 = scmp.lt.s32.totalorder %s16, 3
      %p120 = pnand %p118, %p119
      %p121 = pneg %p120
      // Predicated region
      $region9: #{residual_add.1} parent=5 // pred_check
        _
      $region10: #{residual_add.1} parent=5 // pred_check_branch
        %123 = sbr.rel (%p120) target = $region12
      $region11: #{residual_add.1} parent=5 // pred_region
        %s124 = ssub.s32 %s16, 1
        // Predicated region
        $region13: #{residual_add.1} parent=11 // pred_check
          %p125 = pneg %p63
        $region14: #{residual_add.1} parent=11 // pred_check_branch
          %127 = sbr.rel (%p125) target = $region16
        $region15: #{residual_add.1} parent=11 // pred_region
          %s129 = ssub.s32 8192, 8192
          %130 = vsyncadd [#allocation6], %s129
          %s131 = sshll.u32 [#allocation5], 4
          %s132 = int_to_ptr.vmem [resolvable:$true] %s131
          %137 = dma.hbm_to_vmem [thread:$0]  %s1, 8192, %s132, [#allocation6], 256, 256, 16
        $region16: #{residual_add.1} parent=11 // pred_fallthru
          _
        // Predicated region
        $region17: #{residual_add.1} parent=11 // pred_check
          %p138 = pneg %p84
        $region18: #{residual_add.1} parent=11 // pred_check_branch
          %140 = sbr.rel (%p138) target = $region20
        $region19: #{residual_add.1} parent=11 // pred_region
          _
        $region20: #{residual_add.1} parent=11 // pred_fallthru
          _
      $region12: #{residual_add.1} parent=5 // pred_fallthru
        _
      %p141 = scmp.lt.s32.totalorder %s16, 2
      // Predicated region
      $region21: #{residual_add.1} parent=5 // pred_check
        %p142 = pneg %p141
      $region22: #{residual_add.1} parent=5 // pred_check_branch
        %144 = sbr.rel (%p142) target = $region24
      $region23: #{residual_add.1} parent=5 // pred_region
        // Predicated region
        $region25: #{residual_add.1} parent=23 // pred_check
          %p145 = pneg %p36
        $region26: #{residual_add.1} parent=23 // pred_check_branch
          %147 = sbr.rel (%p145) target = $region28
        $region27: #{residual_add.1} parent=23 // pred_region
          %s148 = sand.u32 %s26, 1
          %s149 = scalar_lea.sflag [#allocation3], %s148
          %s150 = sand.u32 %s26, 1
          %s151 = smul.addr %s150, 16
          %s152 = scalar_lea.vmem [#allocation2], %s151
          %s154 = ssub.s32 256, 256
          %155 = vsyncadd %s149, %s154
          %s156 = smul.addr %s16, 2
          %s157 = smul.addr %s156, 128
          %s158 = scalar_lea.hbm %s0, %s157
          %s160 = sshll.u32 %s152, 4
          %s161 = int_to_ptr.vmem [resolvable:$true] %s160
          %163 = dma.hbm_to_vmem [thread:$0]  %s158, 256, %s161, %s149
        $region28: #{residual_add.1} parent=23 // pred_fallthru
          _
      $region24: #{residual_add.1} parent=5 // pred_fallthru
        _
      %p164 = scmp.le.s32.totalorder 1, %s16
      %p165 = scmp.lt.s32.totalorder %s16, 3
      %p166 = pnand %p164, %p165
      %p167 = pneg %p166
      // Predicated region
      $region29: #{residual_add.1} parent=5 // pred_check
        _
      $region30: #{residual_add.1} parent=5 // pred_check_branch
        %169 = sbr.rel (%p166) target = $region32
      $region31: #{residual_add.1} parent=5 // pred_region
        %s170 = ssub.s32 %s16, 1
        %s171 = sand.u32 %s29, 1
        %s172 = scalar_lea.sflag [#allocation3], %s171
        %s173 = sand.u32 %s29, 1
        %s174 = smul.addr %s173, 16
        %s175 = scalar_lea.vmem [#allocation2], %s174
        // Predicated region
        $region33: #{residual_add.1} parent=31 // pred_check
          %p176 = pneg %p42
        $region34: #{residual_add.1} parent=31 // pred_check_branch
          %178 = sbr.rel (%p176) target = $region36
        $region35: #{residual_add.1} parent=31 // pred_region
          %179 = dma.done %s172, 256
        $region36: #{residual_add.1} parent=31 // pred_fallthru
          _
        // Predicated region
        $region37: #{residual_add.1} parent=31 // pred_check
          %p180 = pneg %p63
        $region38: #{residual_add.1} parent=31 // pred_check_branch
          %182 = sbr.rel (%p180) target = $region40
        $region39: #{residual_add.1} parent=31 // pred_region
          %183 = dma.done [#allocation6], 8192
        $region40: #{residual_add.1} parent=31 // pred_fallthru
          _
        %s184 = sand.u32 %s29, 1
        %s185 = scalar_lea.sflag [#allocation3], %s184
        %s186 = sand.u32 %s29, 1
        %s187 = smul.addr %s186, 16
        %s188 = scalar_lea.vmem [#allocation2], %s187
        %p189 = pneg %p42
        %p190 = pneg %p39
        %p191 = pneg %p63
        %p192 = pneg %p60
        %p193 = pneg %p84
        %p194 = pneg %p81
        %p195 = pneg %p110
        %p196 = pneg %p107
        %s197 = sand.u32 %s97, 1
        %s198 = scalar_lea.sflag [#allocation4], %s197
        %s199 = sand.u32 %s97, 1
        %s200 = smul.addr %s199, 16
        %s201 = scalar_lea.vmem [#allocation7], %s200
        %v202 = vld [vmem:[%s175] sm:$0xff]
        %v203 = vld [vmem:[%s175 + $0x8] sm:$0xff]
        %v204 = vld [vmem:[#allocation5] sm:$0xff]
        %v205 = vld [vmem:[#allocation5 + $0x8] sm:$0xff]
        %v206 = vld [vmem:[#allocation5 + $0x10] sm:$0xff]
        %v207 = vld [vmem:[#allocation5 + $0x18] sm:$0xff]
        %v208 = vld [vmem:[#allocation5 + $0x20] sm:$0xff]
        %v209 = vld [vmem:[#allocation5 + $0x28] sm:$0xff]
        %v210 = vld [vmem:[#allocation5 + $0x30] sm:$0xff]
        %v211 = vld [vmem:[#allocation5 + $0x38] sm:$0xff]
        %v212 = vld [vmem:[#allocation5 + $0x40] sm:$0xff]
        %v213 = vld [vmem:[#allocation5 + $0x48] sm:$0xff]
        %v214 = vld [vmem:[#allocation5 + $0x50] sm:$0xff]
        %v215 = vld [vmem:[#allocation5 + $0x58] sm:$0xff]
        %v216 = vld [vmem:[#allocation5 + $0x60] sm:$0xff]
        %v217 = vld [vmem:[#allocation5 + $0x68] sm:$0xff]
        %v218 = vld [vmem:[#allocation5 + $0x70] sm:$0xff]
        %v219 = vld [vmem:[#allocation5 + $0x78] sm:$0xff]
        %v220 = vld [vmem:[#allocation5 + $0x80] sm:$0xff]
        %v221 = vld [vmem:[#allocation5 + $0x88] sm:$0xff]
        %v222 = vld [vmem:[#allocation5 + $0x90] sm:$0xff]
        %v223 = vld [vmem:[#allocation5 + $0x98] sm:$0xff]
        %v224 = vld [vmem:[#allocation5 + $0xa0] sm:$0xff]
        %v225 = vld [vmem:[#allocation5 + $0xa8] sm:$0xff]
        %v226 = vld [vmem:[#allocation5 + $0xb0] sm:$0xff]
        %v227 = vld [vmem:[#allocation5 + $0xb8] sm:$0xff]
        %v228 = vld [vmem:[#allocation5 + $0xc0] sm:$0xff]
        %v229 = vld [vmem:[#allocation5 + $0xc8] sm:$0xff]
        %v230 = vld [vmem:[#allocation5 + $0xd0] sm:$0xff]
        %v231 = vld [vmem:[#allocation5 + $0xd8] sm:$0xff]
        %v232 = vld [vmem:[#allocation5 + $0xe0] sm:$0xff]
        %v233 = vld [vmem:[#allocation5 + $0xe8] sm:$0xff]
        %v234 = vld [vmem:[#allocation5 + $0xf0] sm:$0xff]
        %v235 = vld [vmem:[#allocation5 + $0xf8] sm:$0xff]
        %v236 = vld [vmem:[#allocation5 + $0x100] sm:$0xff]
        %v237 = vld [vmem:[#allocation5 + $0x108] sm:$0xff]
        %v238 = vld [vmem:[#allocation5 + $0x110] sm:$0xff]
        %v239 = vld [vmem:[#allocation5 + $0x118] sm:$0xff]
        %v240 = vld [vmem:[#allocation5 + $0x120] sm:$0xff]
        %v241 = vld [vmem:[#allocation5 + $0x128] sm:$0xff]
        %v242 = vld [vmem:[#allocation5 + $0x130] sm:$0xff]
        %v243 = vld [vmem:[#allocation5 + $0x138] sm:$0xff]
        %v244 = vld [vmem:[#allocation5 + $0x140] sm:$0xff]
        %v245 = vld [vmem:[#allocation5 + $0x148] sm:$0xff]
        %v246 = vld [vmem:[#allocation5 + $0x150] sm:$0xff]
        %v247 = vld [vmem:[#allocation5 + $0x158] sm:$0xff]
        %v248 = vld [vmem:[#allocation5 + $0x160] sm:$0xff]
        %v249 = vld [vmem:[#allocation5 + $0x168] sm:$0xff]
        %v250 = vld [vmem:[#allocation5 + $0x170] sm:$0xff]
        %v251 = vld [vmem:[#allocation5 + $0x178] sm:$0xff]
        %v252 = vld [vmem:[#allocation5 + $0x180] sm:$0xff]
        %v253 = vld [vmem:[#allocation5 + $0x188] sm:$0xff]
        %v254 = vld [vmem:[#allocation5 + $0x190] sm:$0xff]
        %v255 = vld [vmem:[#allocation5 + $0x198] sm:$0xff]
        %v256 = vld [vmem:[#allocation5 + $0x1a0] sm:$0xff]
        %v257 = vld [vmem:[#allocation5 + $0x1a8] sm:$0xff]
        %v258 = vld [vmem:[#allocation5 + $0x1b0] sm:$0xff]
        %v259 = vld [vmem:[#allocation5 + $0x1b8] sm:$0xff]
        %v260 = vld [vmem:[#allocation5 + $0x1c0] sm:$0xff]
        %v261 = vld [vmem:[#allocation5 + $0x1c8] sm:$0xff]
        %v262 = vld [vmem:[#allocation5 + $0x1d0] sm:$0xff]
        %v263 = vld [vmem:[#allocation5 + $0x1d8] sm:$0xff]
        %v264 = vld [vmem:[#allocation5 + $0x1e0] sm:$0xff]
        %v265 = vld [vmem:[#allocation5 + $0x1e8] sm:$0xff]
        %v266 = vld [vmem:[#allocation5 + $0x1f0] sm:$0xff]
        %v267 = vld [vmem:[#allocation5 + $0x1f8] sm:$0xff]
        %v268 = vld [vmem:[%s2] sm:$0x3]
        %v270 = vlaneseq
        %v271 = vshrl.u32 %v270, 7
        %v272 = vsub.s32 0, %v271
        %v273 = vrot.slane %v268, %v272
        %v274 = vlaneseq
        %v275 = vshrl.u32 %v274, 7
        %v276 = vsub.s32 1, %v275
        %v277 = vrot.slane %v268, %v276
        %280 = vmatprep.subr.mxu0 %v205
        %281 = vmatpush1.msra.mxu0 %v204
        %282 = vmatprep.subr.mxu0 %v207
        %283 = vmatpush1.msra.mxu0 %v206
        %284 = vmatprep.subr.mxu0 %v209
        %285 = vmatpush1.msra.mxu0 %v208
        %286 = vmatprep.subr.mxu0 %v211
        %287 = vmatpush1.msra.mxu0 %v210
        %288 = vmatprep.subr.mxu0 %v213
        %289 = vmatpush1.msra.mxu0 %v212
        %290 = vmatprep.subr.mxu0 %v215
        %291 = vmatpush1.msra.mxu0 %v214
        %292 = vmatprep.subr.mxu0 %v217
        %293 = vmatpush1.msra.mxu0 %v216
        %294 = vmatprep.subr.mxu0 %v219
        %295 = vmatpush1.msra.mxu0 %v218
        %296 = vmatprep.subr.mxu0 %v221
        %297 = vmatpush1.msra.mxu0 %v220
        %298 = vmatprep.subr.mxu0 %v223
        %299 = vmatpush1.msra.mxu0 %v222
        %300 = vmatprep.subr.mxu0 %v225
        %301 = vmatpush1.msra.mxu0 %v224
        %302 = vmatprep.subr.mxu0 %v227
        %303 = vmatpush1.msra.mxu0 %v226
        %304 = vmatprep.subr.mxu0 %v229
        %305 = vmatpush1.msra.mxu0 %v228
        %306 = vmatprep.subr.mxu0 %v231
        %307 = vmatpush1.msra.mxu0 %v230
        %308 = vmatprep.subr.mxu0 %v233
        %309 = vmatpush1.msra.mxu0 %v232
        %310 = vmatprep.subr.mxu0 %v235
        %311 = vmatpush1.msra.mxu0 %v234
        %312 = vmatprep.subr.mxu0 %v237
        %313 = vmatpush1.msra.mxu0 %v236
        %314 = vmatprep.subr.mxu0 %v239
        %315 = vmatpush1.msra.mxu0 %v238
        %316 = vmatprep.subr.mxu0 %v241
        %317 = vmatpush1.msra.mxu0 %v240
        %318 = vmatprep.subr.mxu0 %v243
        %319 = vmatpush1.msra.mxu0 %v242
        %320 = vmatprep.subr.mxu0 %v245
        %321 = vmatpush1.msra.mxu0 %v244
        %322 = vmatprep.subr.mxu0 %v247
        %323 = vmatpush1.msra.mxu0 %v246
        %324 = vmatprep.subr.mxu0 %v249
        %325 = vmatpush1.msra.mxu0 %v248
        %326 = vmatprep.subr.mxu0 %v251
        %327 = vmatpush1.msra.mxu0 %v250
        %328 = vmatprep.subr.mxu0 %v253
        %329 = vmatpush1.msra.mxu0 %v252
        %330 = vmatprep.subr.mxu0 %v255
        %331 = vmatpush1.msra.mxu0 %v254
        %332 = vmatprep.subr.mxu0 %v257
        %333 = vmatpush1.msra.mxu0 %v256
        %334 = vmatprep.subr.mxu0 %v259
        %335 = vmatpush1.msra.mxu0 %v258
        %336 = vmatprep.subr.mxu0 %v261
        %337 = vmatpush1.msra.mxu0 %v260
        %338 = vmatprep.subr.mxu0 %v263
        %339 = vmatpush1.msra.mxu0 %v262
        %340 = vmatprep.subr.mxu0 %v265
        %341 = vmatpush1.msra.mxu0 %v264
        %342 = vmatprep.subr.mxu0 %v267
        %343 = vmatpush1.msra.mxu0 %v266
        %344 = vmatprep.mubr.f32.mxu0 %v203
        %345 = vmatmul.mubr.f32.gmra.mrb[0].mxu0 %v202
        %v346 = vpop.f32.mrb[0].mxu0
        %v347 = vadd.f32 %v273, %v346
        %v348 = vpop.f32.mrb[0].mxu0
        %v349 = vadd.f32 %v277, %v348
        %350 = vdwg.mxu0
        %v351 = vadd.f32 %v202, %v347
        %v352 = vadd.f32 %v203, %v349
        %353 = vst [vmem:[%s201] sm:$0xff] %v351
        %354 = vst [vmem:[%s201 + $0x8] sm:$0xff] %v352
        %s355 = sand.u32 %s97, 1
        %s356 = scalar_lea.sflag [#allocation4], %s355
        %s357 = sand.u32 %s97, 1
        %s358 = smul.addr %s357, 16
        %s359 = scalar_lea.vmem [#allocation7], %s358
        // Predicated region
        $region41: #{residual_add.1} parent=31 // pred_check
          %p360 = pneg %p107
        $region42: #{residual_add.1} parent=31 // pred_check_branch
          %362 = sbr.rel (%p360) target = $region44
        $region43: #{residual_add.1} parent=31 // pred_region
          %s364 = ssub.s32 256, 256
          %365 = vsyncadd %s356, %s364
          %s366 = smul.addr %s21, 2
          %s367 = smul.addr %s366, 128
          %s368 = scalar_lea.hbm %s3, %s367
          %s370 = sshll.u32 %s359, 4
          %s371 = int_to_ptr.vmem [resolvable:$true] %s370
          %373 = dma.vmem_to_hbm [thread:$0]  %s371, 256, %s368, %s356
        $region44: #{residual_add.1} parent=31 // pred_fallthru
          _
      $region32: #{residual_add.1} parent=5 // pred_fallthru
        _
      %p374 = scmp.le.s32.totalorder 2, %s16
      // Predicated region
      $region45: #{residual_add.1} parent=5 // pred_check
        %p375 = pneg %p374
      $region46: #{residual_add.1} parent=5 // pred_check_branch
        %377 = sbr.rel (%p375) target = $region48
      $region47: #{residual_add.1} parent=5 // pred_region
        %s378 = ssub.s32 %s16, 2
        // Predicated region
        $region49: #{residual_add.1} parent=47 // pred_check
          %p379 = pneg %p113
        $region50: #{residual_add.1} parent=47 // pred_check_branch
          %381 = sbr.rel (%p379) target = $region52
        $region51: #{residual_add.1} parent=47 // pred_region
          %s382 = sand.u32 %s98, 1
          %s383 = scalar_lea.sflag [#allocation4], %s382
          %s384 = sand.u32 %s98, 1
          %s385 = smul.addr %s384, 16
          %s386 = scalar_lea.vmem [#allocation7], %s385
          %387 = dma.done %s383, 256
        $region52: #{residual_add.1} parent=47 // pred_fallthru
          _
      $region48: #{residual_add.1} parent=5 // pred_fallthru
        _
    $region6: #{residual_add.1} parent=1 // loop_footer
      %s20 = sadd.s32 1, %s16
    $region7: #{residual_add.1} parent=1 // loop_footer_branch
      %15 = sbr.rel target = $region3
    $region8: #{residual_add.1} parent=1 // loop_exit
      _
    %388 = vsyncpa [#allocation3], 1
    %s389 = scalar_lea.sflag [#allocation3], 1
    %390 = vsyncpa %s389, 1
    %391 = vsyncpa [#allocation6], 1
    %392 = vsyncpa [#allocation4], 1
    %s393 = scalar_lea.sflag [#allocation4], 1
    %394 = vsyncpa %s393, 1

</llo_original>
